<compile_context>
chip_gen: v5e
topology: v5e:2x2
jax: 0.10.0
libtpu: 0.0.40
codegen_flags: <defaults>
</compile_context>

<pallas_src>
import jax
import jax.numpy as jnp
from jax.experimental import pallas as pl
from jax.experimental.pallas import tpu as pltpu


def _make_rope_kernel(attention_scaling: float, half: int):
    def rope_kernel(pos_ref, inv_ref, cos_ref, sin_ref):
        # pos_ref: (tr, 1)   int32/float  in VMEM
        # inv_ref: (1, half) float32      in VMEM (same block every grid step)
        pos = pos_ref[...].astype(jnp.float32)            # (tr, 1)
        inv = inv_ref[...]                                 # (1, half)
        freqs = pos * inv                                  # (tr, half) f32 outer product (VPU)

        c = jnp.cos(freqs)                                 # transcendentals on the half only
        s = jnp.sin(freqs)
        if attention_scaling != 1.0:                       # trace-time constant
            c = c * attention_scaling
            s = s * attention_scaling
        c = c.astype(cos_ref.dtype)
        s = s.astype(sin_ref.dtype)

        # emb = concat(freqs, freqs) realized by writing the same half twice
        # (no lane shuffle; lane-dense stores for real Gemma3 head_dim=256).
        cos_ref[:, 0:half] = c
        cos_ref[:, half:] = c
        sin_ref[:, 0:half] = s
        sin_ref[:, half:] = s

    return rope_kernel


def _round_up8(v: int) -> int:
    return ((v + 7) // 8) * 8


def _vmem_needed_bytes(tr: int, head_dim: int, out_itemsize: int) -> int:
    # cos + sin outputs, double-buffered
    out_bytes = 2 * 2 * tr * head_dim * out_itemsize
    # (tr, 1) positions block is laid out lane-padded as (tr, 128) 32-bit words,
    # double-buffered
    pos_bytes = 2 * tr * 128 * 4
    # inv_freq (1, half) block pads to (8, round_up(half, 128)) f32, x2 buffers
    inv_bytes = 2 * 8 * max(128, _round_up8(head_dim // 2)) * 4
    return out_bytes + pos_bytes + inv_bytes


def _pick_row_tile(rows: int, head_dim: int, out_itemsize: int, block_rows: int) -> int:
    # Target at least 2 grid programs so both v7x TensorCores get tiles
    # ("parallel" grid axis); harmless on single-TC v5e/v6e.
    tr = min(block_rows, pl.cdiv(rows, 2))
    tr = max(8, _round_up8(tr))
    # Auto-shrink if the double-buffered footprint would exceed a safe scoped-VMEM
    # budget (headroom vs. v7x's 64 MiB physical VMEM).
    budget = 40 << 20
    while tr > 8 and _vmem_needed_bytes(tr, head_dim, out_itemsize) > budget:
        tr = max(8, _round_up8(tr // 2))
    return tr


def gemma3_rotary_embedding(x, position_ids, inv_freq, attention_scaling=1.0,
                            block_rows=None):
    """Pallas implementation of Gemma3RotaryEmbedding.forward.

    x:            any array; only its dtype is used (matches PyTorch semantics).
    position_ids: (B, S) integer or float positions.
    inv_freq:     (head_dim//2,) float32 inverse frequencies.
    Returns (cos, sin), each (B, S, head_dim) with dtype x.dtype.
    """
    B, S = position_ids.shape
    half = int(inv_freq.shape[0])
    head_dim = 2 * half
    out_dtype = x.dtype
    out_itemsize = jnp.dtype(out_dtype).itemsize
    rows = B * S

    if block_rows is None:
        block_rows = 4096                       # amortize ~0.35 us per-grid-step overhead

    tr = _pick_row_tile(rows, head_dim, out_itemsize, int(block_rows))
    grid = (pl.cdiv(rows, tr),)

    # Explicit scoped-VMEM limit so the larger tile also compiles on v5e's
    # 16 MiB default; clamped well inside every generation's physical VMEM.
    vmem_needed = _vmem_needed_bytes(tr, head_dim, out_itemsize)
    vmem_limit = max(16 << 20, min(int(vmem_needed * 1.25) + (2 << 20), 56 << 20))

    pos2d = position_ids.reshape(rows, 1)                       # free, row-major
    inv2d = inv_freq.astype(jnp.float32).reshape(1, half)

    kernel = _make_rope_kernel(float(attention_scaling), half)

    cos, sin = pl.pallas_call(
        kernel,
        out_shape=(
            jax.ShapeDtypeStruct((rows, head_dim), out_dtype),
            jax.ShapeDtypeStruct((rows, head_dim), out_dtype),
        ),
        grid=grid,
        in_specs=[
            pl.BlockSpec((tr, 1), lambda r: (r, 0)),            # positions tile
            pl.BlockSpec((1, half), lambda r: (0, 0)),          # inv_freq, same block every step
        ],
        out_specs=(
            pl.BlockSpec((tr, head_dim), lambda r: (r, 0)),
            pl.BlockSpec((tr, head_dim), lambda r: (r, 0)),
        ),
        compiler_params=pltpu.CompilerParams(
            dimension_semantics=("parallel",),                  # megacore split on v7x
            vmem_limit_bytes=vmem_limit,
        ),
    )(pos2d, inv2d)

    return cos.reshape(B, S, head_dim), sin.reshape(B, S, head_dim)


def _reference(x, position_ids, inv_freq, attention_scaling=1.0):
    # Pure-JAX reference mirroring the PyTorch forward exactly.
    inv_exp = inv_freq[None, :, None].astype(jnp.float32)                 # (1, half, 1)
    inv_exp = jnp.broadcast_to(inv_exp, (position_ids.shape[0],) + inv_exp.shape[1:])
    pos_exp = position_ids[:, None, :].astype(jnp.float32)                # (B, 1, S)
    freqs = jnp.matmul(inv_exp, pos_exp).transpose(0, 2, 1)               # (B, S, half)
    emb = jnp.concatenate([freqs, freqs], axis=-1)                        # (B, S, head_dim)
    cos = jnp.cos(emb) * attention_scaling
    sin = jnp.sin(emb) * attention_scaling
    return cos.astype(x.dtype), sin.astype(x.dtype)


if __name__ == "__main__":
    key = jax.random.PRNGKey(0)

    # ---- Test 1: small shape matching the module (head_dim=32, default rope) ----
    B, S, head_dim, hidden = 2, 8, 32, 32
    rope_theta = 10000.0
    attention_scaling = 1.0

    inv_freq = 1.0 / (
        rope_theta ** (jnp.arange(0, head_dim, 2, dtype=jnp.float32) / head_dim)
    )  # (head_dim//2,)

    x = jax.random.normal(key, (B, S, hidden), dtype=jnp.float32)   # only dtype is used
    position_ids = jnp.broadcast_to(jnp.arange(S, dtype=jnp.int32)[None, :], (B, S))

    cos, sin = gemma3_rotary_embedding(x, position_ids, inv_freq, attention_scaling)
    cos = jax.block_until_ready(cos)
    sin = jax.block_until_ready(sin)

    cos_ref, sin_ref = _reference(x, position_ids, inv_freq, attention_scaling)

    assert cos.shape == (B, S, head_dim) and sin.shape == (B, S, head_dim)
    assert cos.dtype == x.dtype and sin.dtype == x.dtype
    assert jnp.allclose(cos, cos_ref, atol=1e-5, rtol=1e-5)
    assert jnp.allclose(sin, sin_ref, atol=1e-5, rtol=1e-5)

    # ---- Test 2: real Gemma3 head_dim=256, multi-tile grid, bf16 out, scaling != 1 ----
    B2, S2, head_dim2 = 2, 512, 256
    inv_freq2 = 1.0 / (
        rope_theta ** (jnp.arange(0, head_dim2, 2, dtype=jnp.float32) / head_dim2)
    )
    key, k1, k2 = jax.random.split(key, 3)
    x2 = jax.random.normal(k1, (B2, S2, 8), dtype=jnp.bfloat16)
    position_ids2 = jax.random.randint(k2, (B2, S2), 0, 8192, dtype=jnp.int32)
    scaling2 = 0.5

    cos2, sin2 = gemma3_rotary_embedding(
        x2, position_ids2, inv_freq2, scaling2, block_rows=256)   # -> grid of 4 tiles
    cos2 = jax.block_until_ready(cos2)
    sin2 = jax.block_until_ready(sin2)

    cos2_ref, sin2_ref = _reference(x2, position_ids2, inv_freq2, scaling2)
    assert cos2.shape == (B2, S2, head_dim2) and cos2.dtype == jnp.bfloat16
    assert jnp.allclose(cos2.astype(jnp.float32), cos2_ref.astype(jnp.float32), atol=5e-2)
    assert jnp.allclose(sin2.astype(jnp.float32), sin2_ref.astype(jnp.float32), atol=5e-2)

    # ---- Test 3: default block_rows path (large tiles, >=2 programs) ----
    B3, S3 = 2, 2048
    position_ids3 = jnp.broadcast_to(jnp.arange(S3, dtype=jnp.int32)[None, :], (B3, S3))
    cos3, sin3 = gemma3_rotary_embedding(x2, position_ids3, inv_freq2, scaling2)
    cos3 = jax.block_until_ready(cos3)
    sin3 = jax.block_until_ready(sin3)
    cos3_ref, sin3_ref = _reference(x2, position_ids3, inv_freq2, scaling2)
    assert jnp.allclose(cos3.astype(jnp.float32), cos3_ref.astype(jnp.float32), atol=5e-2)
    assert jnp.allclose(sin3.astype(jnp.float32), sin3_ref.astype(jnp.float32), atol=5e-2)

    print("KERNEL_OK")
</pallas_src>

<mosaic_0001>
module attributes {stable_mosaic.version = 11 : i64} {
  func.func @rope_kernel(%arg0: i32, %arg1: memref<8x1xi32, #tpu.memory_space<vmem>>, %arg2: memref<1x16xf32, #tpu.memory_space<vmem>>, %arg3: memref<8x32xf32, #tpu.memory_space<vmem>>, %arg4: memref<8x32xf32, #tpu.memory_space<vmem>>) attributes {dimension_semantics = [#tpu.dimension_semantics<parallel>], iteration_bounds = array<i64: 2>, scalar_prefetch = 0 : i64, scratch_operands = 0 : i64, tpu.core_type = #tpu.core_type<tc>, window_params = [{transform_indices = @transform_0, window_bounds = array<i64: 8, 1>}, {pipeline_mode = #tpu.pipeline_mode<synchronous>, transform_indices = @transform_1, window_bounds = array<i64: 1, 16>}, {transform_indices = @transform_2, window_bounds = array<i64: 8, 32>}, {transform_indices = @transform_3, window_bounds = array<i64: 8, 32>}]} {
    %c0 = arith.constant 0 : index
    %c0_0 = arith.constant 0 : index
    %0 = vector.load %arg1[%c0, %c0_0] : memref<8x1xi32, #tpu.memory_space<vmem>>, vector<8x1xi32>
    %1 = arith.sitofp %0 : vector<8x1xi32> to vector<8x1xf32>
    %c0_1 = arith.constant 0 : index
    %c0_2 = arith.constant 0 : index
    %2 = vector.load %arg2[%c0_1, %c0_2] : memref<1x16xf32, #tpu.memory_space<vmem>>, vector<1x16xf32>
    %3 = vector.broadcast %1 : vector<8x1xf32> to vector<8x16xf32>
    %4 = vector.broadcast %2 : vector<1x16xf32> to vector<8x16xf32>
    %5 = arith.mulf %3, %4 : vector<8x16xf32>
    %6 = math.cos %5 : vector<8x16xf32>
    %7 = math.sin %5 : vector<8x16xf32>
    %c0_3 = arith.constant 0 : index
    %c0_4 = arith.constant 0 : index
    %8 = vector.load %arg3[%c0_3, %c0_4] : memref<8x32xf32, #tpu.memory_space<vmem>>, vector<8x16xf32>
    tpu.vector_store %arg3[%c0_3, %c0_4], %6 {strides = array<i32>} : memref<8x32xf32, #tpu.memory_space<vmem>>, vector<8x16xf32>,
    %c0_5 = arith.constant 0 : index
    %c16 = arith.constant 16 : index
    %9 = vector.load %arg3[%c0_5, %c16] : memref<8x32xf32, #tpu.memory_space<vmem>>, vector<8x16xf32>
    tpu.vector_store %arg3[%c0_5, %c16], %6 {strides = array<i32>} : memref<8x32xf32, #tpu.memory_space<vmem>>, vector<8x16xf32>,
    %c0_6 = arith.constant 0 : index
    %c0_7 = arith.constant 0 : index
    %10 = vector.load %arg4[%c0_6, %c0_7] : memref<8x32xf32, #tpu.memory_space<vmem>>, vector<8x16xf32>
    tpu.vector_store %arg4[%c0_6, %c0_7], %7 {strides = array<i32>} : memref<8x32xf32, #tpu.memory_space<vmem>>, vector<8x16xf32>,
    %c0_8 = arith.constant 0 : index
    %c16_9 = arith.constant 16 : index
    %11 = vector.load %arg4[%c0_8, %c16_9] : memref<8x32xf32, #tpu.memory_space<vmem>>, vector<8x16xf32>
    tpu.vector_store %arg4[%c0_8, %c16_9], %7 {strides = array<i32>} : memref<8x32xf32, #tpu.memory_space<vmem>>, vector<8x16xf32>,
    return
  }
  func.func @transform_0(%arg0: i32) -> (i32, i32) {
    %c0_i32 = arith.constant 0 : i32
    %c0_i32_0 = arith.constant 0 : i32
    return %arg0, %c0_i32 : i32, i32
  }
  func.func @transform_1(%arg0: i32) -> (i32, i32) {
    %c0_i32 = arith.constant 0 : i32
    %c0_i32_0 = arith.constant 0 : i32
    %c0_i32_1 = arith.constant 0 : i32
    return %c0_i32, %c0_i32_0 : i32, i32
  }
  func.func @transform_2(%arg0: i32) -> (i32, i32) {
    %c0_i32 = arith.constant 0 : i32
    %c0_i32_0 = arith.constant 0 : i32
    return %arg0, %c0_i32 : i32, i32
  }
  func.func @transform_3(%arg0: i32) -> (i32, i32) {
    %c0_i32 = arith.constant 0 : i32
    %c0_i32_0 = arith.constant 0 : i32
    return %arg0, %c0_i32 : i32, i32
  }
}

</mosaic_0001>

<llo_original>
// kernel: tpu_custom_call.1
$region0: #{tpu_custom_call.1}
  #allocation0 [shape = 'u32[]', space=smem, size = 0x4, offset = 0x4, fixed_abs, tag = 'smem constant byte address 0x4 - core index']
  #allocation1 [shape = 'u32[72,128]{1,0:T(1,128)}', space=vmem, size = 0x9000, scoped, tag = 'internal scratch']
  %s0 = inlined_call_operand.vmem [shape: s32[16,1], index: 0, kind: input, shape index: {}]
  %s1 = inlined_call_operand.vmem [shape: f32[1,16], index: 1, kind: input, shape index: {}]
  %s2 = inlined_call_operand.hbm [shape: f32[16,32], index: 2, kind: output, shape index: {0}]
  %s3 = inlined_call_operand.hbm [shape: f32[16,32], index: 3, kind: output, shape index: {1}]
  %4 = xla_tuple %s2, %s3
  %s5 = sld [smem:[#allocation0]]
  $region49: #{tpu_custom_call.1} parent=0
    _
  %s7 = ssub.s32 1, %s5
  %s8 = scalar_select 0, %s7, %s5
  $region1: #{tpu_custom_call.1} parent=0
    #allocation2 [shape = 'u8[8192]{0}', space=vmem, size = 0x2000, scoped, tag = 'output window, operand 0']
    #allocation3 [shape = 's32[2]{0}', space=sflag, size = 0x8, scoped, tag = 'scoped memory for tpu_custom_call.1']
    #allocation4 [shape = 'u8[8192]{0}', space=vmem, size = 0x2000, scoped, tag = 'output window, operand 1']
    #allocation5 [shape = 's32[2]{0}', space=sflag, size = 0x8, scoped, tag = 'scoped memory for tpu_custom_call.1']
    %9 = vsyncpa [#allocation3], 0
    %s10 = scalar_lea.sflag [#allocation3], 1
    %11 = vsyncpa %s10, 0
    %12 = vsyncpa [#allocation5], 0
    %s13 = scalar_lea.sflag [#allocation5], 1
    %14 = vsyncpa %s13, 0
    loop: start=0, step=1, limit=4
    $region2: #{tpu_custom_call.1} parent=1 // loop_pre_header
      _
    $region3: #{tpu_custom_call.1} parent=1 // loop_header
      %s16 = sphi 0, %s20
      %p17 = scmp.ge.s32.totalorder %s16, 4
      %s26 = sphi 0, %s28
      %s29 = sphi 0, %s26
      %s30 = sphi 0, %s29
      %s46 = sphi 0, %s30
      %s50 = sphi 0, %s50
      %s52 = sphi 0, %s50
      %s53 = sphi 0, %s52
      %s67 = sphi 0, %s53
      %s73 = sphi 0, %s75
      %s76 = sphi 0, %s73
      %s77 = sphi 0, %s76
      %s93 = sphi 0, %s77
      %s99 = sphi 0, %s101
      %s102 = sphi 0, %s99
      %s103 = sphi 0, %s102
      %s119 = sphi 0, %s103
    $region4: #{tpu_custom_call.1} parent=1 // loop_header_branch
      %19 = sbr.rel (%p17) target = $region8
    $region5: #{tpu_custom_call.1} parent=1 // loop_body
      %s21 = ssub.s32 %s16, 1
      %s22 = ssub.s32 %s16, 2
      %s23 = sadd.s32 %s16, 1
      %s24 = ssub.s32 %s16, %s23
      %p25 = scmp.eq.s32.totalorder %s24, 0
      %s27 = sadd.s32 %s26, 1
      %s28 = scalar_select %p25, %s26, %s27
      %p31 = pneg %p25
      %p32 = scmp.eq.s32.totalorder %s16, 1
      %p33 = por %p31, %p32
      %p34 = scmp.ne.s32.totalorder %s26, %s29
      %p35 = scmp.eq.s32.totalorder %s16, 0
      %p36 = por %p34, %p35
      %p37 = scmp.ne.s32.totalorder %s26, %s29
      %p38 = scmp.eq.s32.totalorder %s21, 1
      %p39 = por %p37, %p38
      %p40 = scmp.ne.s32.totalorder %s29, %s30
      %p41 = scmp.eq.s32.totalorder %s21, 0
      %p42 = por %p40, %p41
      %p43 = scmp.ne.s32.totalorder %s29, %s30
      %p44 = scmp.eq.s32.totalorder %s22, 1
      %p45 = por %p43, %p44
      %p47 = scmp.ne.s32.totalorder %s30, %s46
      %p48 = scmp.eq.s32.totalorder %s22, 0
      %p49 = por %p47, %p48
      %s51 = sadd.s32 %s50, 1
      %p54 = scmp.eq.s32.totalorder %s16, 1
      %p55 = scmp.ne.s32.totalorder %s50, %s52
      %p56 = scmp.eq.s32.totalorder %s16, 0
      %p57 = por %p55, %p56
      %p58 = scmp.ne.s32.totalorder %s50, %s52
      %p59 = scmp.eq.s32.totalorder %s21, 1
      %p60 = por %p58, %p59
      %p61 = scmp.ne.s32.totalorder %s52, %s53
      %p62 = scmp.eq.s32.totalorder %s21, 0
      %p63 = por %p61, %p62
      %p64 = scmp.ne.s32.totalorder %s52, %s53
      %p65 = scmp.eq.s32.totalorder %s22, 1
      %p66 = por %p64, %p65
      %p68 = scmp.ne.s32.totalorder %s53, %s67
      %p69 = scmp.eq.s32.totalorder %s22, 0
      %p70 = por %p68, %p69
      %s71 = ssub.s32 %s16, %s23
      %p72 = scmp.eq.s32.totalorder %s71, 0
      %s74 = sadd.s32 %s73, 1
      %s75 = scalar_select %p72, %s73, %s74
      %p78 = pneg %p72
      %p79 = scmp.eq.s32.totalorder %s16, 1
      %p80 = por %p78, %p79
      %p81 = scmp.ne.s32.totalorder %s73, %s76
      %p82 = scmp.eq.s32.totalorder %s16, 0
      %p83 = por %p81, %p82
      %p84 = scmp.ne.s32.totalorder %s73, %s76
      %p85 = scmp.eq.s32.totalorder %s21, 1
      %p86 = por %p84, %p85
      %p87 = scmp.ne.s32.totalorder %s76, %s77
      %p88 = scmp.eq.s32.totalorder %s21, 0
      %p89 = por %p87, %p88
      %p90 = scmp.ne.s32.totalorder %s76, %s77
      %p91 = scmp.eq.s32.totalorder %s22, 1
      %p92 = por %p90, %p91
      %p94 = scmp.ne.s32.totalorder %s77, %s93
      %p95 = scmp.eq.s32.totalorder %s22, 0
      %p96 = por %p94, %p95
      %s97 = ssub.s32 %s16, %s23
      %p98 = scmp.eq.s32.totalorder %s97, 0
      %s100 = sadd.s32 %s99, 1
      %s101 = scalar_select %p98, %s99, %s100
      %p104 = pneg %p98
      %p105 = scmp.eq.s32.totalorder %s16, 1
      %p106 = por %p104, %p105
      %p107 = scmp.ne.s32.totalorder %s99, %s102
      %p108 = scmp.eq.s32.totalorder %s16, 0
      %p109 = por %p107, %p108
      %p110 = scmp.ne.s32.totalorder %s99, %s102
      %p111 = scmp.eq.s32.totalorder %s21, 1
      %p112 = por %p110, %p111
      %p113 = scmp.ne.s32.totalorder %s102, %s103
      %p114 = scmp.eq.s32.totalorder %s21, 0
      %p115 = por %p113, %p114
      %p116 = scmp.ne.s32.totalorder %s102, %s103
      %p117 = scmp.eq.s32.totalorder %s22, 1
      %p118 = por %p116, %p117
      %p120 = scmp.ne.s32.totalorder %s103, %s119
      %p121 = scmp.eq.s32.totalorder %s22, 0
      %p122 = por %p120, %p121
      %p123 = scmp.le.s32.totalorder 1, %s16
      %p124 = scmp.lt.s32.totalorder %s16, 3
      %p125 = pnand %p123, %p124
      %p126 = pneg %p125
      // Predicated region
      $region9: #{tpu_custom_call.1} parent=5 // pred_check
        _
      $region10: #{tpu_custom_call.1} parent=5 // pred_check_branch
        %128 = sbr.rel (%p125) target = $region12
      $region11: #{tpu_custom_call.1} parent=5 // pred_region
        %s129 = ssub.s32 %s16, 1
        // Predicated region
        $region13: #{tpu_custom_call.1} parent=11 // pred_check
          %p130 = pneg %p63
        $region14: #{tpu_custom_call.1} parent=11 // pred_check_branch
          %132 = sbr.rel (%p130) target = $region16
        $region15: #{tpu_custom_call.1} parent=11 // pred_region
          _
        $region16: #{tpu_custom_call.1} parent=11 // pred_fallthru
          _
      $region12: #{tpu_custom_call.1} parent=5 // pred_fallthru
        _
      %p133 = scmp.lt.s32.totalorder %s16, 2
      // Predicated region
      $region17: #{tpu_custom_call.1} parent=5 // pred_check
        %p134 = pneg %p133
      $region18: #{tpu_custom_call.1} parent=5 // pred_check_branch
        %136 = sbr.rel (%p134) target = $region20
      $region19: #{tpu_custom_call.1} parent=5 // pred_region
        // Predicated region
        $region21: #{tpu_custom_call.1} parent=19 // pred_check
          %p137 = pneg %p36
        $region22: #{tpu_custom_call.1} parent=19 // pred_check_branch
          %139 = sbr.rel (%p137) target = $region24
        $region23: #{tpu_custom_call.1} parent=19 // pred_region
          %p140 = scmp.lt.s32.totalorder %s16, 1
          %s141 = scalar_select %p140, %s16, 1
          %s142 = smul.addr %s141, 8
          %s143 = scalar_lea.vmem %s0, %s142
        $region24: #{tpu_custom_call.1} parent=19 // pred_fallthru
          _
      $region20: #{tpu_custom_call.1} parent=5 // pred_fallthru
        _
      %p144 = scmp.le.s32.totalorder 1, %s16
      %p145 = scmp.lt.s32.totalorder %s16, 3
      %p146 = pnand %p144, %p145
      %p147 = pneg %p146
      // Predicated region
      $region25: #{tpu_custom_call.1} parent=5 // pred_check
        _
      $region26: #{tpu_custom_call.1} parent=5 // pred_check_branch
        %149 = sbr.rel (%p146) target = $region28
      $region27: #{tpu_custom_call.1} parent=5 // pred_region
        %s150 = ssub.s32 %s16, 1
        %p151 = scmp.lt.s32.totalorder %s21, 1
        %s152 = scalar_select %p151, %s21, 1
        %s153 = smul.addr %s152, 8
        %s154 = scalar_lea.vmem %s0, %s153
        %p155 = pneg %p42
        %p156 = pneg %p39
        %p157 = pneg %p63
        %p158 = pneg %p60
        %p159 = pneg %p89
        %p160 = pneg %p86
        %s161 = sand.u32 %s76, 1
        %s162 = scalar_lea.sflag [#allocation3], %s161
        %s163 = sand.u32 %s76, 1
        %s164 = smul.addr %s163, 8
        %s165 = scalar_lea.vmem [#allocation2], %s164
        %p166 = pneg %p115
        %p167 = pneg %p112
        %s168 = sand.u32 %s102, 1
        %s169 = scalar_lea.sflag [#allocation5], %s168
        %s170 = sand.u32 %s102, 1
        %s171 = smul.addr %s170, 8
        %s172 = scalar_lea.vmem [#allocation4], %s171
        %p173 = scmp.lt.s32.totalorder %s21, 1
        %s174 = scalar_select %p173, %s21, 1
        %s175 = smul.addr %s174, 8
        %s176 = scalar_lea.vmem %s0, %s175
        %v177 = vld [vmem:[%s176] sm:$0xff]
        %v178 = vcvt.s32.f32 %v177
        %v179 = vld [vmem:[%s1] sm:$0x1]
        %181 = vset.pattern.permute.xlu0 0
        %182 = vperm.xlu0 %181, %v178
        %v183 = vpop.permute.xlu0 %182
        %v186 = vperm.slane %v179, 0
        %v188 = vmul.f32 %v183, %v186
        %v189 = vand.u32 2147483647, %v188
        %vm190 = vcmp.le.f32.partialorder %v189, 0.7853982
        %vm191 = vcmp.lt.s32.totalorder %v188, 0
        %v192 = vand.u32 %v188, 2139095040
        %v193 = vshrl.u32 %v192, 23
        %v194 = vsub.s32 %v193, 127
        %v195 = vand.u32 2147483647, %v188
        %v196 = vand.u32 %v195, 8388607
        %v197 = vor.u32 %v196, 8388608
        %v198 = vsub.s32 0, %v197
        %v199 = vadd.s32 %v194, 1
        %vm200 = vcmp.gt.s32.totalorder %v199, 0
        %v201 = vsel %vm200, %v199, 0
        %v202 = vshrl.u32 %v201, 5
        %v203 = vand.u32 %v201, 31
        %v204 = vsub.s32 32, %v203
        %v205 = vshrl.u32 683565275, %v204
        %v206 = vshll.u32 683565275, %v203
        %v207 = vshrl.u32 2475754826, %v204
        %v208 = vor.u32 %v206, %v207
        %v209 = vshll.u32 2475754826, %v203
        %v210 = vshrl.u32 2131351028, %v204
        %v211 = vor.u32 %v209, %v210
        %v212 = vshll.u32 2131351028, %v203
        %v213 = vshrl.u32 2102212464, %v204
        %v214 = vor.u32 %v212, %v213
        %v215 = vshll.u32 2102212464, %v203
        %v216 = vshrl.u32 920167782, %v204
        %v217 = vor.u32 %v215, %v216
        %v218 = vshll.u32 920167782, %v203
        %v219 = vshrl.u32 1326507024, %v204
        %v220 = vor.u32 %v218, %v219
        %vm221 = vcmp.lt.s32.totalorder %v202, 1
        %vm222 = vcmp.lt.s32.totalorder %v202, 2
        %vm223 = vcmp.lt.s32.totalorder %v202, 3
        %vm224 = vcmp.lt.s32.totalorder %v202, 4
        %v225 = vsel %vm221, %v205, %v208
        %v226 = vsel %vm224, %v214, 2102212464
        %v227 = vsel %vm223, %v211, %v226
        %v228 = vsel %vm222, %v225, %v227
        %v229 = vsel %vm221, %v208, %v211
        %v230 = vsel %vm224, %v217, 920167782
        %v231 = vsel %vm223, %v214, %v230
        %v232 = vsel %vm222, %v229, %v231
        %v233 = vsel %vm221, %v211, %v214
        %v234 = vsel %vm224, %v220, 1326507024
        %v235 = vsel %vm223, %v217, %v234
        %v236 = vsel %vm222, %v233, %v235
        %v237 = vshll.u32 %v197, 8
        %v238 = vand.u32 %v237, 65535
        %v239 = vshrl.u32 %v237, 16
        %v240 = vand.u32 %v236, 65535
        %v241 = vshrl.u32 %v236, 16
        %v242 = vmul.u32 %v238, %v240
        %v243 = vmul.u32 %v238, %v241
        %v244 = vmul.u32 %v239, %v240
        %v245 = vmul.u32 %v239, %v241
        %v246 = vshll.u32 %v243, 16
        %v247 = vshrl.u32 %v243, 16
        %v248 = vshll.u32 %v244, 16
        %v249 = vshrl.u32 %v244, 16
        %vm250 = vc.u32 %v242, %v246
        %v251 = vsel %vm250, 1, 0
        %v252 = vadd.s32 %v242, %v246
        %v253 = vadd.s32 %v245, %v251
        %vm254 = vc.u32 %v252, %v248
        %v255 = vsel %vm254, 1, 0
        %v256 = vadd.s32 %v252, %v248
        %v257 = vadd.s32 %v253, %v255
        %v258 = vadd.s32 %v257, %v247
        %v259 = vadd.s32 %v258, %v249
        %v260 = vand.u32 %v237, 65535
        %v261 = vshrl.u32 %v237, 16
        %v262 = vand.u32 %v232, 65535
        %v263 = vshrl.u32 %v232, 16
        %v264 = vmul.u32 %v260, %v262
        %v265 = vmul.u32 %v260, %v263
        %v266 = vmul.u32 %v261, %v262
        %v267 = vmul.u32 %v261, %v263
        %v268 = vshll.u32 %v265, 16
        %v269 = vshrl.u32 %v265, 16
        %v270 = vshll.u32 %v266, 16
        %v271 = vshrl.u32 %v266, 16
        %vm272 = vc.u32 %v264, %v268
        %v273 = vsel %vm272, 1, 0
        %v274 = vadd.s32 %v264, %v268
        %v275 = vadd.s32 %v267, %v273
        %vm276 = vc.u32 %v274, %v270
        %v277 = vsel %vm276, 1, 0
        %v278 = vadd.s32 %v274, %v270
        %v279 = vadd.s32 %v275, %v277
        %v280 = vadd.s32 %v279, %v269
        %v281 = vadd.s32 %v280, %v271
        %v282 = vmul.u32 %v237, %v228
        %v283 = vadd.s32 %v259, %v278
        %vm284 = vc.u32 %v259, %v278
        %v285 = vadd.s32 %v281, 1
        %v286 = vsel %vm284, %v285, %v281
        %v287 = vadd.s32 %v282, %v286
        %v288 = vadd.s32 %v287, 536870912
        %v289 = vshrl.u32 %v288, 30
        %v290 = vshll.u32 %v289, 30
        %v291 = vsub.s32 %v287, %v290
        %vm292 = vcmp.lt.s32.totalorder %v291, 0
        %v293 = vsub.s32 0, %v291
        %v294 = vsel %vm292, %v293, %v291
        %v295 = vclz %v294
        %v296 = vsub.s32 %v295, 2
        %vm297 = vcmp.gt.s32.totalorder 0, %v296
        %v298 = vsel %vm297, 0, %v296
        %v299 = vsub.s32 32, %v298
        %v300 = vshll.u32 %v291, %v298
        %v301 = vshrl.u32 %v283, %v299
        %v302 = vor.u32 %v300, %v301
        %v303 = vsub.s32 4294967266, %v298
        %v304 = vadd.s32 %v303, 127
        %v305 = vshll.u32 %v304, 23
        %v306 = vor.u32 4788187, %v305
        %v307 = vand.u32 2147483647, %v306
        %v309 = vcvt.s32.f32 %v302
        %v310 = vmul.f32 %v309, %v307
        %v311 = vxor.u32 %v310, 2147483648
        %v312 = vsel %vm191, %v311, %v310
        %v313 = vsub.s32 4, %v289
        %v314 = vsel %vm191, %v313, %v289
        %v315 = vsel %vm190, %v188, %v312
        %v316 = vsel %vm190, 0, %v314
        %v317 = vmul.f32 %v315, %v315
        %v318 = vmul.f32 %v317, -0.001358992
        %v319 = vadd.f32 %v318, 0.041655596
        %v320 = vmul.f32 %v317, %v319
        %v321 = vadd.f32 %v320, -0.4999988
        %v322 = vmul.f32 %v317, %v321
        %v323 = vadd.f32 1.0, %v322
        %v324 = vmul.f32 %v315, %v315
        %v325 = vmul.f32 %v324, -0.00019511016
        %v326 = vadd.f32 %v325, 0.008332121
        %v327 = vmul.f32 %v324, %v326
        %v328 = vadd.f32 %v327, -0.16666654
        %v329 = vmul.f32 %v324, %v328
        %v330 = vadd.f32 %v329, 1.0
        %v331 = vmul.f32 %v330, %v315
        %vm332 = vweird.f32 %v188
        %v333 = vand.u32 %v316, 3
        %vm334 = vcmp.lt.s32.totalorder %v333, 2
        %vm335 = vcmp.eq.s32.totalorder %v333, 0
        %v336 = vxor.u32 %v331, 2147483648
        %v337 = vsel %vm335, %v323, %v336
        %vm338 = vcmp.eq.s32.totalorder %v333, 2
        %v339 = vxor.u32 %v323, 2147483648
        %v340 = vsel %vm338, %v339, %v331
        %v341 = vsel %vm334, %v337, %v340
        %v342 = vsel %vm332, nan, %v341
        %v343 = vand.u32 2147483647, %v188
        %vm344 = vcmp.le.f32.partialorder %v343, 0.7853982
        %vm345 = vcmp.lt.s32.totalorder %v188, 0
        %v346 = vand.u32 %v188, 2139095040
        %v347 = vshrl.u32 %v346, 23
        %v348 = vsub.s32 %v347, 127
        %v349 = vand.u32 2147483647, %v188
        %v350 = vand.u32 %v349, 8388607
        %v351 = vor.u32 %v350, 8388608
        %v352 = vsub.s32 0, %v351
        %v353 = vadd.s32 %v348, 1
        %vm354 = vcmp.gt.s32.totalorder %v353, 0
        %v355 = vsel %vm354, %v353, 0
        %v356 = vshrl.u32 %v355, 5
        %v357 = vand.u32 %v355, 31
        %v358 = vsub.s32 32, %v357
        %v359 = vshrl.u32 683565275, %v358
        %v360 = vshll.u32 683565275, %v357
        %v361 = vshrl.u32 2475754826, %v358
        %v362 = vor.u32 %v360, %v361
        %v363 = vshll.u32 2475754826, %v357
        %v364 = vshrl.u32 2131351028, %v358
        %v365 = vor.u32 %v363, %v364
        %v366 = vshll.u32 2131351028, %v357
        %v367 = vshrl.u32 2102212464, %v358
        %v368 = vor.u32 %v366, %v367
        %v369 = vshll.u32 2102212464, %v357
        %v370 = vshrl.u32 920167782, %v358
        %v371 = vor.u32 %v369, %v370
        %v372 = vshll.u32 920167782, %v357
        %v373 = vshrl.u32 1326507024, %v358
        %v374 = vor.u32 %v372, %v373
        %vm375 = vcmp.lt.s32.totalorder %v356, 1
        %vm376 = vcmp.lt.s32.totalorder %v356, 2
        %vm377 = vcmp.lt.s32.totalorder %v356, 3
        %vm378 = vcmp.lt.s32.totalorder %v356, 4
        %v379 = vsel %vm375, %v359, %v362
        %v380 = vsel %vm378, %v368, 2102212464
        %v381 = vsel %vm377, %v365, %v380
        %v382 = vsel %vm376, %v379, %v381
        %v383 = vsel %vm375, %v362, %v365
        %v384 = vsel %vm378, %v371, 920167782
        %v385 = vsel %vm377, %v368, %v384
        %v386 = vsel %vm376, %v383, %v385
        %v387 = vsel %vm375, %v365, %v368
        %v388 = vsel %vm378, %v374, 1326507024
        %v389 = vsel %vm377, %v371, %v388
        %v390 = vsel %vm376, %v387, %v389
        %v391 = vshll.u32 %v351, 8
        %v392 = vand.u32 %v391, 65535
        %v393 = vshrl.u32 %v391, 16
        %v394 = vand.u32 %v390, 65535
        %v395 = vshrl.u32 %v390, 16
        %v396 = vmul.u32 %v392, %v394
        %v397 = vmul.u32 %v392, %v395
        %v398 = vmul.u32 %v393, %v394
        %v399 = vmul.u32 %v393, %v395
        %v400 = vshll.u32 %v397, 16
        %v401 = vshrl.u32 %v397, 16
        %v402 = vshll.u32 %v398, 16
        %v403 = vshrl.u32 %v398, 16
        %vm404 = vc.u32 %v396, %v400
        %v405 = vsel %vm404, 1, 0
        %v406 = vadd.s32 %v396, %v400
        %v407 = vadd.s32 %v399, %v405
        %vm408 = vc.u32 %v406, %v402
        %v409 = vsel %vm408, 1, 0
        %v410 = vadd.s32 %v406, %v402
        %v411 = vadd.s32 %v407, %v409
        %v412 = vadd.s32 %v411, %v401
        %v413 = vadd.s32 %v412, %v403
        %v414 = vand.u32 %v391, 65535
        %v415 = vshrl.u32 %v391, 16
        %v416 = vand.u32 %v386, 65535
        %v417 = vshrl.u32 %v386, 16
        %v418 = vmul.u32 %v414, %v416
        %v419 = vmul.u32 %v414, %v417
        %v420 = vmul.u32 %v415, %v416
        %v421 = vmul.u32 %v415, %v417
        %v422 = vshll.u32 %v419, 16
        %v423 = vshrl.u32 %v419, 16
        %v424 = vshll.u32 %v420, 16
        %v425 = vshrl.u32 %v420, 16
        %vm426 = vc.u32 %v418, %v422
        %v427 = vsel %vm426, 1, 0
        %v428 = vadd.s32 %v418, %v422
        %v429 = vadd.s32 %v421, %v427
        %vm430 = vc.u32 %v428, %v424
        %v431 = vsel %vm430, 1, 0
        %v432 = vadd.s32 %v428, %v424
        %v433 = vadd.s32 %v429, %v431
        %v434 = vadd.s32 %v433, %v423
        %v435 = vadd.s32 %v434, %v425
        %v436 = vmul.u32 %v391, %v382
        %v437 = vadd.s32 %v413, %v432
        %vm438 = vc.u32 %v413, %v432
        %v439 = vadd.s32 %v435, 1
        %v440 = vsel %vm438, %v439, %v435
        %v441 = vadd.s32 %v436, %v440
        %v442 = vadd.s32 %v441, 536870912
        %v443 = vshrl.u32 %v442, 30
        %v444 = vshll.u32 %v443, 30
        %v445 = vsub.s32 %v441, %v444
        %vm446 = vcmp.lt.s32.totalorder %v445, 0
        %v447 = vsub.s32 0, %v445
        %v448 = vsel %vm446, %v447, %v445
        %v449 = vclz %v448
        %v450 = vsub.s32 %v449, 2
        %vm451 = vcmp.gt.s32.totalorder 0, %v450
        %v452 = vsel %vm451, 0, %v450
        %v453 = vsub.s32 32, %v452
        %v454 = vshll.u32 %v445, %v452
        %v455 = vshrl.u32 %v437, %v453
        %v456 = vor.u32 %v454, %v455
        %v457 = vsub.s32 4294967266, %v452
        %v458 = vadd.s32 %v457, 127
        %v459 = vshll.u32 %v458, 23
        %v460 = vor.u32 4788187, %v459
        %v461 = vand.u32 2147483647, %v460
        %v463 = vcvt.s32.f32 %v456
        %v464 = vmul.f32 %v463, %v461
        %v465 = vxor.u32 %v464, 2147483648
        %v466 = vsel %vm345, %v465, %v464
        %v467 = vsub.s32 4, %v443
        %v468 = vsel %vm345, %v467, %v443
        %v469 = vsel %vm344, %v188, %v466
        %v470 = vsel %vm344, 0, %v468
        %v471 = vmul.f32 %v469, %v469
        %v472 = vmul.f32 %v471, -0.001358992
        %v473 = vadd.f32 %v472, 0.041655596
        %v474 = vmul.f32 %v471, %v473
        %v475 = vadd.f32 %v474, -0.4999988
        %v476 = vmul.f32 %v471, %v475
        %v477 = vadd.f32 1.0, %v476
        %v478 = vmul.f32 %v469, %v469
        %v479 = vmul.f32 %v478, -0.00019511016
        %v480 = vadd.f32 %v479, 0.008332121
        %v481 = vmul.f32 %v478, %v480
        %v482 = vadd.f32 %v481, -0.16666654
        %v483 = vmul.f32 %v478, %v482
        %v484 = vadd.f32 %v483, 1.0
        %v485 = vmul.f32 %v484, %v469
        %vm486 = vweird.f32 %v188
        %v487 = vadd.s32 %v470, 3
        %v488 = vand.u32 %v487, 3
        %vm489 = vcmp.lt.s32.totalorder %v488, 2
        %vm490 = vcmp.eq.s32.totalorder %v488, 0
        %v491 = vxor.u32 %v485, 2147483648
        %v492 = vsel %vm490, %v477, %v491
        %vm493 = vcmp.eq.s32.totalorder %v488, 2
        %v494 = vxor.u32 %v477, 2147483648
        %v495 = vsel %vm493, %v494, %v485
        %v496 = vsel %vm489, %v492, %v495
        %v497 = vsel %vm486, nan, %v496
        %vm498 = vcmask 130048
        %499 = vst.msk [vmem:[%s165] sm:$0xff] %vm498, %v342
        %501 = vrot.lane.b32.xlu0 %v342, 16
        %v502 = vpop.permute.xlu0 %501
        %vm504 = vcmask 261248
        %505 = vst.msk [vmem:[%s165] sm:$0xff] %vm504, %v502
        %506 = vst.msk [vmem:[%s172] sm:$0xff] %vm498, %v497
        %508 = vrot.lane.b32.xlu0 %v497, 16
        %v509 = vpop.permute.xlu0 %508
        %511 = vst.msk [vmem:[%s172] sm:$0xff] %vm504, %v509
        %s512 = sand.u32 %s76, 1
        %s513 = scalar_lea.sflag [#allocation3], %s512
        %s514 = sand.u32 %s76, 1
        %s515 = smul.addr %s514, 8
        %s516 = scalar_lea.vmem [#allocation2], %s515
        %s517 = sand.u32 %s102, 1
        %s518 = scalar_lea.sflag [#allocation5], %s517
        %s519 = sand.u32 %s102, 1
        %s520 = smul.addr %s519, 8
        %s521 = scalar_lea.vmem [#allocation4], %s520
        // Predicated region
        $region29: #{tpu_custom_call.1} parent=27 // pred_check
          %p522 = pneg %p86
        $region30: #{tpu_custom_call.1} parent=27 // pred_check_branch
          %524 = sbr.rel (%p522) target = $region32
        $region31: #{tpu_custom_call.1} parent=27 // pred_region
          %526 = vsyncadd %s513, 0
          %s527 = smul.addr %s21, 8
          %s528 = scalar_lea.hbm %s2, %s527
          %s530 = sshll.u32 %s516, 4
          %s531 = int_to_ptr.vmem [resolvable:$true] %s530
          %s532 = sshll.u32 %s528, 4
          %s533 = int_to_ptr.hbm [resolvable:$true] %s532
          %535 = dma.vmem_to_hbm [thread:$0]  %s531, 128, %s533, %s513
        $region32: #{tpu_custom_call.1} parent=27 // pred_fallthru
          _
        // Predicated region
        $region33: #{tpu_custom_call.1} parent=27 // pred_check
          %p536 = pneg %p112
        $region34: #{tpu_custom_call.1} parent=27 // pred_check_branch
          %538 = sbr.rel (%p536) target = $region36
        $region35: #{tpu_custom_call.1} parent=27 // pred_region
          %540 = vsyncadd %s518, 0
          %s541 = smul.addr %s21, 8
          %s542 = scalar_lea.hbm %s3, %s541
          %s544 = sshll.u32 %s521, 4
          %s545 = int_to_ptr.vmem [resolvable:$true] %s544
          %s546 = sshll.u32 %s542, 4
          %s547 = int_to_ptr.hbm [resolvable:$true] %s546
          %549 = dma.vmem_to_hbm [thread:$0]  %s545, 128, %s547, %s518
        $region36: #{tpu_custom_call.1} parent=27 // pred_fallthru
          _
      $region28: #{tpu_custom_call.1} parent=5 // pred_fallthru
        _
      %p550 = scmp.le.s32.totalorder 2, %s16
      // Predicated region
      $region37: #{tpu_custom_call.1} parent=5 // pred_check
        %p551 = pneg %p550
      $region38: #{tpu_custom_call.1} parent=5 // pred_check_branch
        %553 = sbr.rel (%p551) target = $region40
      $region39: #{tpu_custom_call.1} parent=5 // pred_region
        %s554 = ssub.s32 %s16, 2
        // Predicated region
        $region41: #{tpu_custom_call.1} parent=39 // pred_check
          %p555 = pneg %p92
        $region42: #{tpu_custom_call.1} parent=39 // pred_check_branch
          %557 = sbr.rel (%p555) target = $region44
        $region43: #{tpu_custom_call.1} parent=39 // pred_region
          %s558 = sand.u32 %s77, 1
          %s559 = scalar_lea.sflag [#allocation3], %s558
          %s560 = sand.u32 %s77, 1
          %s561 = smul.addr %s560, 8
          %s562 = scalar_lea.vmem [#allocation2], %s561
          %564 = dma.done %s559, 128
        $region44: #{tpu_custom_call.1} parent=39 // pred_fallthru
          _
        // Predicated region
        $region45: #{tpu_custom_call.1} parent=39 // pred_check
          %p565 = pneg %p118
        $region46: #{tpu_custom_call.1} parent=39 // pred_check_branch
          %567 = sbr.rel (%p565) target = $region48
        $region47: #{tpu_custom_call.1} parent=39 // pred_region
          %s568 = sand.u32 %s103, 1
          %s569 = scalar_lea.sflag [#allocation5], %s568
          %s570 = sand.u32 %s103, 1
          %s571 = smul.addr %s570, 8
          %s572 = scalar_lea.vmem [#allocation4], %s571
          %574 = dma.done %s569, 128
        $region48: #{tpu_custom_call.1} parent=39 // pred_fallthru
          _
      $region40: #{tpu_custom_call.1} parent=5 // pred_fallthru
        _
    $region6: #{tpu_custom_call.1} parent=1 // loop_footer
      %s20 = sadd.s32 1, %s16
    $region7: #{tpu_custom_call.1} parent=1 // loop_footer_branch
      %15 = sbr.rel target = $region3
    $region8: #{tpu_custom_call.1} parent=1 // loop_exit
      _
    %575 = vsyncpa [#allocation3], 1
    %s576 = scalar_lea.sflag [#allocation3], 1
    %577 = vsyncpa %s576, 1
    %578 = vsyncpa [#allocation5], 1
    %s579 = scalar_lea.sflag [#allocation5], 1
    %580 = vsyncpa %s579, 1

</llo_original>
